<compile_context>
chip_gen: v7x
topology: tpu7x:2x2x1
jax: 0.10.0
libtpu: 0.0.40
codegen_flags: <defaults>
</compile_context>

<pallas_src>
import functools

import jax
import jax.numpy as jnp
from jax import lax
from jax.experimental import pallas as pl
from jax.experimental.pallas import tpu as pltpu

XI = 10.0
EPS = 1.0
IP = 1


def _l2_normalize(d):
    """Per-sample L2 normalization over flattened features (== _l2_normalize)."""
    nrm = jnp.sqrt(jnp.sum(d * d, axis=-1, keepdims=True))
    return d / (nrm + 1e-8)


def _softmax_and_logsoftmax(logits):
    """Numerically stable softmax + log_softmax along the last axis."""
    m = jnp.max(logits, axis=-1, keepdims=True)
    z = logits - m
    e = jnp.exp(z)
    s = jnp.sum(e, axis=-1, keepdims=True)
    return e / s, z - jnp.log(s)


def _forward(lhs, w_kd, b):
    """logits[n, k] = sum_d lhs[n, d] * w_kd[k, d] + b[0, k]."""
    return lax.dot_general(lhs, w_kd, (((1,), (1,)), ((), ())),
                           preferred_element_type=jnp.float32) + b


def _vat_kernel(x_ref, w_ref, b_ref, d_ref, out_ref, *, xi, eps, ip, inv_b):
    x = x_ref[...]            # [B, D]
    w = w_ref[...]            # [K, D]  (class axis on sublanes, D lane-dense)
    b = b_ref[...]            # [1, K]
    bsz = x.shape[0]

    # d = rand(x.shape) - 0.5 ; d = _l2_normalize(d)
    d = _l2_normalize(d_ref[...])

    # Fused: pred = softmax(model(x)) and the first power-iteration forward
    # model(x + xi*d) share one MXU matmul (d is independent of pred).
    lhs = jnp.concatenate([x, x + xi * d], axis=0)     # [2B, D]
    all_logits = _forward(lhs, w, b)                   # [2B, K]
    pred, logp = _softmax_and_logsoftmax(all_logits[:bsz])

    # Power iterations.  For a linear model:
    #   dKL/dlogits ∝ (p_hat - pred) ;   dKL/dd ∝ (p_hat - pred) @ W
    # Positive scale factors (xi, 1/B) vanish under the L2 normalization.
    lh = all_logits[bsz:]
    for it in range(ip):
        if it > 0:
            lh = _forward(x + xi * d, w, b)
        p_hat, _ = _softmax_and_logsoftmax(lh)
        grad = jnp.dot(p_hat - pred, w, preferred_element_type=jnp.float32)
        d = _l2_normalize(grad)

    # r_adv = d * eps ; lds = KL(pred || softmax(model(x + r_adv)), batchmean)
    _, logp_hat = _softmax_and_logsoftmax(_forward(x + eps * d, w, b))
    per_row = jnp.sum(pred * (logp - logp_hat), axis=-1, keepdims=True)  # [B,1]
    out_ref[...] = jnp.sum(per_row, axis=0, keepdims=True) * inv_b       # [1,1]


def vat_loss(x_nchw, w_kd, b, key, xi=XI, eps=EPS, ip=IP):
    """Mirrors VATLoss.forward(model, x) for the synthetic linear model.

    w_kd: [K, D] weight in nn.Linear [out_features, in_features] layout.
    b:    [1, K] bias.
    key:  jax.random key for the initial random direction d.
    """
    B = x_nchw.shape[0]
    x = x_nchw.reshape(B, -1).astype(jnp.float32)            # [B, D]
    D = x.shape[1]
    K = w_kd.shape[0]

    w_kd = jnp.asarray(w_kd, jnp.float32)                    # [K, D]
    b_row = jnp.asarray(b, jnp.float32).reshape(1, K)        # [1, K]
    d0 = jax.random.uniform(key, (B, D), jnp.float32) - 0.5  # torch.rand - 0.5

    kernel = functools.partial(_vat_kernel, xi=float(xi), eps=float(eps),
                               ip=int(ip), inv_b=1.0 / float(B))
    vmem = pl.BlockSpec(memory_space=pltpu.MemorySpace.VMEM)
    lds = pl.pallas_call(
        kernel,
        out_shape=jax.ShapeDtypeStruct((1, 1), jnp.float32),
        in_specs=[vmem, vmem, vmem, vmem],   # x, W [K,D], b, d0
        out_specs=vmem,
    )(x, w_kd, b_row, d0)
    return lds[0, 0]


if __name__ == "__main__":
    key = jax.random.PRNGKey(0)
    kx, kw, kd = jax.random.split(key, 3)

    B, C, H, W = 2, 4, 16, 16          # NCHW input, D = 1024
    K = 8                              # number of classes
    D = C * H * W

    x = jax.random.normal(kx, (B, C, H, W), dtype=jnp.float32)
    w_kd = jax.random.normal(kw, (K, D), dtype=jnp.float32) * 0.02  # [K, D]
    b = jnp.zeros((1, K), dtype=jnp.float32)

    lds = vat_loss(x, w_kd, b, kd)
    jax.block_until_ready(lds)
    assert bool(jnp.isfinite(lds))
    print("KERNEL_OK")
</pallas_src>

<mosaic_0001>
module attributes {stable_mosaic.version = 11 : i64} {
  func.func @_vat_kernel(%arg0: memref<2x1024xf32, #tpu.memory_space<vmem>>, %arg1: memref<8x1024xf32, #tpu.memory_space<vmem>>, %arg2: memref<1x8xf32, #tpu.memory_space<vmem>>, %arg3: memref<2x1024xf32, #tpu.memory_space<vmem>>, %arg4: memref<1x1xf32, #tpu.memory_space<vmem>>) attributes {dimension_semantics = [], scalar_prefetch = 0 : i64, scratch_operands = 0 : i64, tpu.core_type = #tpu.core_type<tc>} {
    %c0 = arith.constant 0 : index
    %c0_0 = arith.constant 0 : index
    %0 = vector.load %arg0[%c0, %c0_0] : memref<2x1024xf32, #tpu.memory_space<vmem>>, vector<2x1024xf32>
    %c0_1 = arith.constant 0 : index
    %c0_2 = arith.constant 0 : index
    %1 = vector.load %arg1[%c0_1, %c0_2] : memref<8x1024xf32, #tpu.memory_space<vmem>>, vector<8x1024xf32>
    %c0_3 = arith.constant 0 : index
    %c0_4 = arith.constant 0 : index
    %2 = vector.load %arg2[%c0_3, %c0_4] : memref<1x8xf32, #tpu.memory_space<vmem>>, vector<1x8xf32>
    %c0_5 = arith.constant 0 : index
    %c0_6 = arith.constant 0 : index
    %3 = vector.load %arg3[%c0_5, %c0_6] : memref<2x1024xf32, #tpu.memory_space<vmem>>, vector<2x1024xf32>
    %4 = arith.mulf %3, %3 : vector<2x1024xf32>
    %cst = arith.constant dense<0.000000e+00> : vector<2xf32>
    %5 = vector.multi_reduction <add>, %4, %cst [1] : vector<2x1024xf32> to vector<2xf32>
    %6 = vector.shape_cast %5 : vector<2xf32> to vector<2x1xf32>
    %7 = math.sqrt %6 : vector<2x1xf32>
    %cst_7 = arith.constant 9.99999993E-9 : f32
    %8 = vector.broadcast %cst_7 : f32 to vector<2x1xf32>
    %9 = arith.addf %7, %8 : vector<2x1xf32>
    %10 = vector.broadcast %9 : vector<2x1xf32> to vector<2x1024xf32>
    %11 = arith.divf %3, %10 : vector<2x1024xf32>
    %cst_8 = arith.constant 1.000000e+01 : f32
    %12 = vector.broadcast %cst_8 : f32 to vector<2x1024xf32>
    %13 = arith.mulf %12, %11 : vector<2x1024xf32>
    %14 = arith.addf %0, %13 : vector<2x1024xf32>
    %15 = tpu.concatenate %0, %14 in 0 : vector<2x1024xf32>, vector<2x1024xf32> -> vector<4x1024xf32>
    %cst_9 = arith.constant dense<0.000000e+00> : vector<4x8xf32>
    %16 = tpu.matmul %15, %1, %cst_9 {dimension_numbers = #tpu.dot_dimension_numbers<[1], [1], [0], [0], [0, 0, 1, 0], [], []>} : vector<4x1024xf32>, vector<8x1024xf32>, vector<4x8xf32> -> vector<4x8xf32>
    %17 = vector.broadcast %2 : vector<1x8xf32> to vector<4x8xf32>
    %18 = arith.addf %16, %17 : vector<4x8xf32>
    %19 = vector.extract_strided_slice %18 {offsets = [0, 0], sizes = [2, 8], strides = [1, 1]} : vector<4x8xf32> to vector<2x8xf32>
    %cst_10 = arith.constant dense<0xFF800000> : vector<2xf32>
    %20 = vector.multi_reduction <maximumf>, %19, %cst_10 [1] : vector<2x8xf32> to vector<2xf32>
    %21 = vector.shape_cast %20 : vector<2xf32> to vector<2x1xf32>
    %22 = vector.broadcast %21 : vector<2x1xf32> to vector<2x8xf32>
    %23 = arith.subf %19, %22 : vector<2x8xf32>
    %24 = math.exp %23 : vector<2x8xf32>
    %cst_11 = arith.constant dense<0.000000e+00> : vector<2xf32>
    %25 = vector.multi_reduction <add>, %24, %cst_11 [1] : vector<2x8xf32> to vector<2xf32>
    %26 = vector.shape_cast %25 : vector<2xf32> to vector<2x1xf32>
    %27 = vector.broadcast %26 : vector<2x1xf32> to vector<2x8xf32>
    %28 = arith.divf %24, %27 : vector<2x8xf32>
    %29 = math.log %26 : vector<2x1xf32>
    %30 = vector.broadcast %29 : vector<2x1xf32> to vector<2x8xf32>
    %31 = arith.subf %23, %30 : vector<2x8xf32>
    %32 = vector.extract_strided_slice %18 {offsets = [2, 0], sizes = [2, 8], strides = [1, 1]} : vector<4x8xf32> to vector<2x8xf32>
    %cst_12 = arith.constant dense<0xFF800000> : vector<2xf32>
    %33 = vector.multi_reduction <maximumf>, %32, %cst_12 [1] : vector<2x8xf32> to vector<2xf32>
    %34 = vector.shape_cast %33 : vector<2xf32> to vector<2x1xf32>
    %35 = vector.broadcast %34 : vector<2x1xf32> to vector<2x8xf32>
    %36 = arith.subf %32, %35 : vector<2x8xf32>
    %37 = math.exp %36 : vector<2x8xf32>
    %cst_13 = arith.constant dense<0.000000e+00> : vector<2xf32>
    %38 = vector.multi_reduction <add>, %37, %cst_13 [1] : vector<2x8xf32> to vector<2xf32>
    %39 = vector.shape_cast %38 : vector<2xf32> to vector<2x1xf32>
    %40 = vector.broadcast %39 : vector<2x1xf32> to vector<2x8xf32>
    %41 = arith.divf %37, %40 : vector<2x8xf32>
    %42 = arith.subf %41, %28 : vector<2x8xf32>
    %cst_14 = arith.constant dense<0.000000e+00> : vector<2x1024xf32>
    %43 = tpu.matmul %42, %1, %cst_14 {dimension_numbers = #tpu.dot_dimension_numbers<[1], [0], [0], [1], [0, 0, 1, 1], [], []>} : vector<2x8xf32>, vector<8x1024xf32>, vector<2x1024xf32> -> vector<2x1024xf32>
    %44 = arith.mulf %43, %43 : vector<2x1024xf32>
    %cst_15 = arith.constant dense<0.000000e+00> : vector<2xf32>
    %45 = vector.multi_reduction <add>, %44, %cst_15 [1] : vector<2x1024xf32> to vector<2xf32>
    %46 = vector.shape_cast %45 : vector<2xf32> to vector<2x1xf32>
    %47 = math.sqrt %46 : vector<2x1xf32>
    %cst_16 = arith.constant 9.99999993E-9 : f32
    %48 = vector.broadcast %cst_16 : f32 to vector<2x1xf32>
    %49 = arith.addf %47, %48 : vector<2x1xf32>
    %50 = vector.broadcast %49 : vector<2x1xf32> to vector<2x1024xf32>
    %51 = arith.divf %43, %50 : vector<2x1024xf32>
    %cst_17 = arith.constant 1.000000e+00 : f32
    %52 = vector.broadcast %cst_17 : f32 to vector<2x1024xf32>
    %53 = arith.mulf %52, %51 : vector<2x1024xf32>
    %54 = arith.addf %0, %53 : vector<2x1024xf32>
    %cst_18 = arith.constant dense<0.000000e+00> : vector<2x8xf32>
    %55 = tpu.matmul %54, %1, %cst_18 {dimension_numbers = #tpu.dot_dimension_numbers<[1], [1], [0], [0], [0, 0, 1, 0], [], []>} : vector<2x1024xf32>, vector<8x1024xf32>, vector<2x8xf32> -> vector<2x8xf32>
    %56 = vector.broadcast %2 : vector<1x8xf32> to vector<2x8xf32>
    %57 = arith.addf %55, %56 : vector<2x8xf32>
    %cst_19 = arith.constant dense<0xFF800000> : vector<2xf32>
    %58 = vector.multi_reduction <maximumf>, %57, %cst_19 [1] : vector<2x8xf32> to vector<2xf32>
    %59 = vector.shape_cast %58 : vector<2xf32> to vector<2x1xf32>
    %60 = vector.broadcast %59 : vector<2x1xf32> to vector<2x8xf32>
    %61 = arith.subf %57, %60 : vector<2x8xf32>
    %62 = math.exp %61 : vector<2x8xf32>
    %cst_20 = arith.constant dense<0.000000e+00> : vector<2xf32>
    %63 = vector.multi_reduction <add>, %62, %cst_20 [1] : vector<2x8xf32> to vector<2xf32>
    %64 = vector.shape_cast %63 : vector<2xf32> to vector<2x1xf32>
    %65 = math.log %64 : vector<2x1xf32>
    %66 = vector.broadcast %65 : vector<2x1xf32> to vector<2x8xf32>
    %67 = arith.subf %61, %66 : vector<2x8xf32>
    %68 = arith.subf %31, %67 : vector<2x8xf32>
    %69 = arith.mulf %28, %68 : vector<2x8xf32>
    %cst_21 = arith.constant dense<0.000000e+00> : vector<2xf32>
    %70 = vector.multi_reduction <add>, %69, %cst_21 [1] : vector<2x8xf32> to vector<2xf32>
    %71 = vector.shape_cast %70 : vector<2xf32> to vector<2x1xf32>
    %cst_22 = arith.constant dense<0.000000e+00> : vector<1xf32>
    %72 = vector.multi_reduction <add>, %71, %cst_22 [0] : vector<2x1xf32> to vector<1xf32>
    %73 = vector.shape_cast %72 : vector<1xf32> to vector<1x1xf32>
    %cst_23 = arith.constant 5.000000e-01 : f32
    %74 = vector.broadcast %cst_23 : f32 to vector<1x1xf32>
    %75 = arith.mulf %73, %74 : vector<1x1xf32>
    %c0_24 = arith.constant 0 : index
    %c0_25 = arith.constant 0 : index
    %76 = vector.load %arg4[%c0_24, %c0_25] : memref<1x1xf32, #tpu.memory_space<vmem>>, vector<1x1xf32>
    tpu.vector_store %arg4[%c0_24, %c0_25], %75 {strides = array<i32>} : memref<1x1xf32, #tpu.memory_space<vmem>>, vector<1x1xf32>,
    return
  }
}

</mosaic_0001>

<llo_original>
// kernel: tpu_custom_call.1
$region0: #{tpu_custom_call.1}
  #allocation0 [shape = 'u32[]', space=smem, size = 0x4, offset = 0x4, fixed_abs, tag = 'smem constant byte address 0x4 - core index']
  #allocation1 [shape = 'u32[144,128]{1,0:T(1,128)}', space=vmem, size = 0x12000, scoped, tag = 'internal scratch']
  %s0 = inlined_call_operand.hbm [shape: f32[2,1024], index: 0, kind: input, shape index: {}]
  %s1 = inlined_call_operand.hbm [shape: f32[8,1024], index: 1, kind: input, shape index: {}]
  %s2 = inlined_call_operand.vmem [shape: f32[1,8], index: 2, kind: input, shape index: {}]
  %s3 = inlined_call_operand.hbm [shape: f32[2,1024], index: 3, kind: input, shape index: {}]
  %s4 = inlined_call_operand.hbm [shape: f32[1,1], index: 4, kind: output, shape index: {}]
  %s5 = sld [smem:[#allocation0]]
  $region38: #{tpu_custom_call.1} parent=0
    _
  %s7 = ssub.s32 1, %s5
  %s8 = scalar_select 0, %s7, %s5
  $region1: #{tpu_custom_call.1} parent=0
    #allocation2 [shape = 'u8[8192]{0}', space=vmem, size = 0x2000, scoped, tag = 'input window, operand 0, single buffered']
    #allocation3 [shape = 's32[1]{0}', space=sflag, size = 0x4, scoped, tag = 'scoped memory for tpu_custom_call.1']
    #allocation4 [shape = 's32[1]{0}', space=sflag, size = 0x4, scoped, tag = 'scoped memory for tpu_custom_call.1']
    #allocation5 [shape = 'u8[32768]{0}', space=vmem, size = 0x8000, scoped, tag = 'input window, operand 1, single buffered']
    #allocation6 [shape = 's32[1]{0}', space=sflag, size = 0x4, scoped, tag = 'scoped memory for tpu_custom_call.1']
    #allocation7 [shape = 'u8[8192]{0}', space=vmem, size = 0x2000, scoped, tag = 'input window, operand 3, single buffered']
    #allocation8 [shape = 'u8[512]{0}', space=vmem, size = 0x400, scoped, tag = 'output window, operand 0, single buffered']
    %9 = vsyncpa [#allocation3], 0
    %10 = vsyncpa [#allocation6], 0
    %11 = vsyncpa [#allocation4], 0
    // Predicated region
    $region2: #{tpu_custom_call.1} parent=1 // pred_check
      _
    $region3: #{tpu_custom_call.1} parent=1 // pred_check_branch
      %13 = sbr.rel (0) target = $region5
    $region4: #{tpu_custom_call.1} parent=1 // pred_region
      %s15 = ssub.s32 256, 256
      %16 = vsyncadd [#allocation3], %s15
      %s18 = sshll.u32 [#allocation2], 4
      %s19 = int_to_ptr.vmem [resolvable:$true] %s18
      %21 = dma.hbm_to_vmem [thread:$0]  %s0, 256, %s19, [#allocation3]
    $region5: #{tpu_custom_call.1} parent=1 // pred_fallthru
      _
    // Predicated region
    $region6: #{tpu_custom_call.1} parent=1 // pred_check
      _
    $region7: #{tpu_custom_call.1} parent=1 // pred_check_branch
      %23 = sbr.rel (0) target = $region9
    $region8: #{tpu_custom_call.1} parent=1 // pred_region
      %s25 = ssub.s32 1024, 1024
      %26 = vsyncadd [#allocation6], %s25
      %s28 = sshll.u32 [#allocation5], 4
      %s29 = int_to_ptr.vmem [resolvable:$true] %s28
      %31 = dma.hbm_to_vmem [thread:$0]  %s1, 1024, %s29, [#allocation6]
    $region9: #{tpu_custom_call.1} parent=1 // pred_fallthru
      _
    // Predicated region
    $region10: #{tpu_custom_call.1} parent=1 // pred_check
      _
    $region11: #{tpu_custom_call.1} parent=1 // pred_check_branch
      %33 = sbr.rel (0) target = $region13
    $region12: #{tpu_custom_call.1} parent=1 // pred_region
      _
    $region13: #{tpu_custom_call.1} parent=1 // pred_fallthru
      _
    // Predicated region
    $region14: #{tpu_custom_call.1} parent=1 // pred_check
      _
    $region15: #{tpu_custom_call.1} parent=1 // pred_check_branch
      %35 = sbr.rel (0) target = $region17
    $region16: #{tpu_custom_call.1} parent=1 // pred_region
      %s37 = ssub.s32 256, 256
      %38 = vsyncadd [#allocation6], %s37
      %s40 = sshll.u32 [#allocation7], 4
      %s41 = int_to_ptr.vmem [resolvable:$true] %s40
      %43 = dma.hbm_to_vmem [thread:$0]  %s3, 256, %s41, [#allocation6]
    $region17: #{tpu_custom_call.1} parent=1 // pred_fallthru
      _
    // Predicated region
    $region18: #{tpu_custom_call.1} parent=1 // pred_check
      _
    $region19: #{tpu_custom_call.1} parent=1 // pred_check_branch
      %45 = sbr.rel (0) target = $region21
    $region20: #{tpu_custom_call.1} parent=1 // pred_region
      %46 = dma.done [#allocation3], 256
    $region21: #{tpu_custom_call.1} parent=1 // pred_fallthru
      _
    // Predicated region
    $region22: #{tpu_custom_call.1} parent=1 // pred_check
      _
    $region23: #{tpu_custom_call.1} parent=1 // pred_check_branch
      %48 = sbr.rel (0) target = $region25
    $region24: #{tpu_custom_call.1} parent=1 // pred_region
      %49 = dma.done [#allocation6], 1024
    $region25: #{tpu_custom_call.1} parent=1 // pred_fallthru
      _
    // Predicated region
    $region26: #{tpu_custom_call.1} parent=1 // pred_check
      _
    $region27: #{tpu_custom_call.1} parent=1 // pred_check_branch
      %51 = sbr.rel (0) target = $region29
    $region28: #{tpu_custom_call.1} parent=1 // pred_region
      %52 = dma.done [#allocation6], 256
    $region29: #{tpu_custom_call.1} parent=1 // pred_fallthru
      _
    %v53 = vld [vmem:[#allocation2] sm:$0xff]
    %v54 = vld [vmem:[#allocation2 + $0x8] sm:$0xff]
    %v55 = vld [vmem:[#allocation5] sm:$0xff]
    %v56 = vld [vmem:[#allocation5 + $0x8] sm:$0xff]
    %v57 = vld [vmem:[#allocation5 + $0x10] sm:$0xff]
    %v58 = vld [vmem:[#allocation5 + $0x18] sm:$0xff]
    %v59 = vld [vmem:[#allocation5 + $0x20] sm:$0xff]
    %v60 = vld [vmem:[#allocation5 + $0x28] sm:$0xff]
    %v61 = vld [vmem:[#allocation5 + $0x30] sm:$0xff]
    %v62 = vld [vmem:[#allocation5 + $0x38] sm:$0xff]
    %v63 = vld [vmem:[%s2] sm:$0x1]
    %v64 = vld [vmem:[#allocation7] sm:$0xff]
    %v65 = vld [vmem:[#allocation7 + $0x8] sm:$0xff]
    %v66 = vmul.f32 %v64, %v64
    %v67 = vmul.f32 %v65, %v65
    %v70 = vcombine.high %v66, %v66
    %v72 = vunpack.c.l.s4 1983009808
    %v73 = vunpack.c.0.s8 %v72
    %v74 = vlaneseq
    %v75 = vshrl.u32 %v74, 7
    %v76 = vsub.s32 %v73, %v75
    %v77 = vrot.slane %v66, %v76
    %v79 = vunpack.c.l.s4 1983009808
    %v80 = vunpack.c.0.s8 %v79
    %v81 = vlaneseq
    %v82 = vshrl.u32 %v81, 7
    %v83 = vsub.s32 %v80, %v82
    %v84 = vrot.slane %v70, %v83
    %v85 = vcombine.high %v77, %v77
    %v86 = vcombine.high %v84, %v84
    %v87 = vcombine.high %v67, %v67
    %v89 = vunpack.c.l.s4 1983009808
    %v90 = vunpack.c.0.s8 %v89
    %v91 = vlaneseq
    %v92 = vshrl.u32 %v91, 7
    %v93 = vsub.s32 %v90, %v92
    %v94 = vrot.slane %v67, %v93
    %v96 = vunpack.c.l.s4 1983009808
    %v97 = vunpack.c.0.s8 %v96
    %v98 = vlaneseq
    %v99 = vshrl.u32 %v98, 7
    %v100 = vsub.s32 %v97, %v99
    %v101 = vrot.slane %v87, %v100
    %v102 = vcombine.high %v94, %v94
    %v103 = vcombine.high %v101, %v101
    %vm112 = vcmask 1041408
    %v113 = vsel %vm112, %v77, 0.0
    %v114 = vsel %vm112, %v85, 0.0
    %v115 = vadd.f32 %v113, %v114
    %v116 = vsel %vm112, %v84, 0.0
    %v117 = vadd.f32 %v115, %v116
    %v118 = vsel %vm112, %v86, 0.0
    %v119 = vadd.f32 %v117, %v118
    %v120 = vsel %vm112, %v94, 0.0
    %v121 = vadd.f32 %v119, %v120
    %v122 = vsel %vm112, %v102, 0.0
    %v123 = vadd.f32 %v121, %v122
    %v124 = vsel %vm112, %v101, 0.0
    %v125 = vadd.f32 %v123, %v124
    %v126 = vsel %vm112, %v103, 0.0
    %v127 = vadd.f32 %v125, %v126
    %128 = vadd.xlane.f32.xlu0 %v127
    %v129 = vpop.xlane.xlu0 %128
    %v130 = vrsqrt.pop %v129
    %v131 = vmul.f32 %v129, %v130
    %vm132 = vcmp.eq.f32.partialorder %v129, inf
    %v133 = vsel %vm132, %v129, %v131
    %vm134 = vcmp.eq.f32.partialorder %v129, 0.0
    %v135 = vand.u32 %v129, 2147483648
    %v136 = vsel %vm134, %v135, %v133
    %v137 = vadd.f32 %v136, 1e-08
    %v140 = vunpack.c.l.s4 269488144
    %v141 = vunpack.c.0.s8 %v140
    %v142 = vlaneseq
    %v143 = vshrl.u32 %v142, 7
    %v144 = vsub.s32 %v141, %v143
    %v145 = vrot.slane %v137, %v144
    %v147 = vrcp.pop %v145
    %v148 = vmul.f32 %v64, %v147
    %v149 = vmul.f32 %v65, %v147
    %v150 = vmul.f32 %v148, 10.0
    %v151 = vmul.f32 %v149, 10.0
    %v152 = vadd.f32 %v53, %v150
    %v153 = vadd.f32 %v54, %v151
    %v156 = vcombine.high %v53, %v53
    %v158 = vunpack.c.l.s4 1983009808
    %v159 = vunpack.c.0.s8 %v158
    %v160 = vlaneseq
    %v161 = vshrl.u32 %v160, 7
    %v162 = vsub.s32 %v159, %v161
    %v163 = vrot.slane %v53, %v162
    %v165 = vunpack.c.l.s4 1983009808
    %v166 = vunpack.c.0.s8 %v165
    %v167 = vlaneseq
    %v168 = vshrl.u32 %v167, 7
    %v169 = vsub.s32 %v166, %v168
    %v170 = vrot.slane %v156, %v169
    %v171 = vcombine.high %v163, %v163
    %v172 = vcombine.high %v170, %v170
    %v173 = vcombine.high %v54, %v54
    %v175 = vunpack.c.l.s4 1983009808
    %v176 = vunpack.c.0.s8 %v175
    %v177 = vlaneseq
    %v178 = vshrl.u32 %v177, 7
    %v179 = vsub.s32 %v176, %v178
    %v180 = vrot.slane %v54, %v179
    %v182 = vunpack.c.l.s4 1983009808
    %v183 = vunpack.c.0.s8 %v182
    %v184 = vlaneseq
    %v185 = vshrl.u32 %v184, 7
    %v186 = vsub.s32 %v183, %v185
    %v187 = vrot.slane %v173, %v186
    %v188 = vcombine.high %v180, %v180
    %v189 = vcombine.high %v187, %v187
    %v200 = vcombine.low %v152, %v152
    %v202 = vunpack.c.l.s4 1983009808
    %v203 = vunpack.c.0.s8 %v202
    %v204 = vlaneseq
    %v205 = vshrl.u32 %v204, 7
    %v206 = vsub.s32 %v203, %v205
    %v207 = vrot.slane %v200, %v206
    %v209 = vunpack.c.l.s4 1983009808
    %v210 = vunpack.c.0.s8 %v209
    %v211 = vlaneseq
    %v212 = vshrl.u32 %v211, 7
    %v213 = vsub.s32 %v210, %v212
    %v214 = vrot.slane %v152, %v213
    %v215 = vcombine.high %v207, %v207
    %v216 = vcombine.high %v214, %v214
    %v217 = vcombine.low %v153, %v153
    %v219 = vunpack.c.l.s4 1983009808
    %v220 = vunpack.c.0.s8 %v219
    %v221 = vlaneseq
    %v222 = vshrl.u32 %v221, 7
    %v223 = vsub.s32 %v220, %v222
    %v224 = vrot.slane %v217, %v223
    %v226 = vunpack.c.l.s4 1983009808
    %v227 = vunpack.c.0.s8 %v226
    %v228 = vlaneseq
    %v229 = vshrl.u32 %v228, 7
    %v230 = vsub.s32 %v227, %v229
    %v231 = vrot.slane %v153, %v230
    %v232 = vcombine.high %v224, %v224
    %v233 = vcombine.high %v231, %v231
    %v242 = vsel %vm112, %v163, %v207
    %v243 = vsel %vm112, %v171, %v215
    %v244 = vsel %vm112, %v170, %v214
    %v245 = vsel %vm112, %v172, %v216
    %v246 = vsel %vm112, %v180, %v224
    %v247 = vsel %vm112, %v188, %v232
    %v248 = vsel %vm112, %v187, %v231
    %v249 = vsel %vm112, %v189, %v233
    %v251 = vlaneseq
    %v252 = vshrl.u32 %v251, 7
    %v253 = vsub.s32 0, %v252
    %v254 = vrot.slane %v63, %v253
    %256 = vmatprep.subr.mxu0 %v56
    %257 = vmatpush1.xpose.msra.mxu0 %v55
    %258 = vmatprep.subr.mxu0 0.0
    %259 = vmatpush1.xpose.msra.mxu0 0.0
    %260 = vmatprep.subr.mxu0 0.0
    %261 = vmatpush1.xpose.msra.mxu0 0.0
    %262 = vmatprep.subr.mxu0 0.0
    %263 = vmatpush1.xpose.msra.mxu0 0.0
    %264 = vmatprep.subr.mxu0 0.0
    %265 = vmatpush1.xpose.msra.mxu0 0.0
    %266 = vmatprep.subr.mxu0 0.0
    %267 = vmatpush1.xpose.msra.mxu0 0.0
    %268 = vmatprep.subr.mxu0 0.0
    %269 = vmatpush1.xpose.msra.mxu0 0.0
    %270 = vmatprep.subr.mxu0 0.0
    %271 = vmatpush1.xpose.msra.mxu0 0.0
    %272 = vmatprep.subr.mxu0 0.0
    %273 = vmatpush1.xpose.msra.mxu0 0.0
    %274 = vmatprep.subr.mxu0 0.0
    %275 = vmatpush1.xpose.msra.mxu0 0.0
    %276 = vmatprep.subr.mxu0 0.0
    %277 = vmatpush1.xpose.msra.mxu0 0.0
    %278 = vmatprep.subr.mxu0 0.0
    %279 = vmatpush1.xpose.msra.mxu0 0.0
    %280 = vmatprep.subr.mxu0 0.0
    %281 = vmatpush1.xpose.msra.mxu0 0.0
    %282 = vmatprep.subr.mxu0 0.0
    %283 = vmatpush1.xpose.msra.mxu0 0.0
    %284 = vmatprep.subr.mxu0 0.0
    %285 = vmatpush1.xpose.msra.mxu0 0.0
    %286 = vmatprep.subr.mxu0 0.0
    %287 = vmatpush1.xpose.msra.mxu0 0.0
    %288 = vmatprep.subr.mxu0 0.0
    %289 = vmatpush1.xpose.msra.mxu0 0.0
    %290 = vmatprep.subr.mxu0 0.0
    %291 = vmatpush1.xpose.msra.mxu0 0.0
    %292 = vmatprep.subr.mxu0 0.0
    %293 = vmatpush1.xpose.msra.mxu0 0.0
    %294 = vmatprep.subr.mxu0 0.0
    %295 = vmatpush1.xpose.msra.mxu0 0.0
    %296 = vmatprep.subr.mxu0 0.0
    %297 = vmatpush1.xpose.msra.mxu0 0.0
    %298 = vmatprep.subr.mxu0 0.0
    %299 = vmatpush1.xpose.msra.mxu0 0.0
    %300 = vmatprep.subr.mxu0 0.0
    %301 = vmatpush1.xpose.msra.mxu0 0.0
    %302 = vmatprep.subr.mxu0 0.0
    %303 = vmatpush1.xpose.msra.mxu0 0.0
    %304 = vmatprep.subr.mxu0 0.0
    %305 = vmatpush1.xpose.msra.mxu0 0.0
    %306 = vmatprep.subr.mxu0 0.0
    %307 = vmatpush1.xpose.msra.mxu0 0.0
    %308 = vmatprep.subr.mxu0 0.0
    %309 = vmatpush1.xpose.msra.mxu0 0.0
    %310 = vmatprep.subr.mxu0 0.0
    %311 = vmatpush1.xpose.msra.mxu0 0.0
    %312 = vmatprep.subr.mxu0 0.0
    %313 = vmatpush1.xpose.msra.mxu0 0.0
    %314 = vmatprep.subr.mxu0 0.0
    %315 = vmatpush1.xpose.msra.mxu0 0.0
    %316 = vmatprep.subr.mxu0 0.0
    %317 = vmatpush1.xpose.msra.mxu0 0.0
    %318 = vmatprep.subr.mxu0 0.0
    %319 = vmatpush1.xpose.msra.mxu0 0.0
    %320 = vmatprep.mubr.f32.mxu0 %v243
    %321 = vmatmul.mubr.f32.gmra.mrb[0].mxu0 %v242
    %v322 = vpop.f32.mrb[0].mxu0
    %v323 = vadd.f32 %v254, %v322
    %v324 = vpop.f32.mrb[0].mxu0
    %325 = vdwg.mxu0
    %326 = vmatprep.subr.mxu0 %v58
    %327 = vmatpush1.xpose.msra.mxu0 %v57
    %328 = vmatprep.subr.mxu0 0.0
    %329 = vmatpush1.xpose.msra.mxu0 0.0
    %330 = vmatprep.subr.mxu0 0.0
    %331 = vmatpush1.xpose.msra.mxu0 0.0
    %332 = vmatprep.subr.mxu0 0.0
    %333 = vmatpush1.xpose.msra.mxu0 0.0
    %334 = vmatprep.subr.mxu0 0.0
    %335 = vmatpush1.xpose.msra.mxu0 0.0
    %336 = vmatprep.subr.mxu0 0.0
    %337 = vmatpush1.xpose.msra.mxu0 0.0
    %338 = vmatprep.subr.mxu0 0.0
    %339 = vmatpush1.xpose.msra.mxu0 0.0
    %340 = vmatprep.subr.mxu0 0.0
    %341 = vmatpush1.xpose.msra.mxu0 0.0
    %342 = vmatprep.subr.mxu0 0.0
    %343 = vmatpush1.xpose.msra.mxu0 0.0
    %344 = vmatprep.subr.mxu0 0.0
    %345 = vmatpush1.xpose.msra.mxu0 0.0
    %346 = vmatprep.subr.mxu0 0.0
    %347 = vmatpush1.xpose.msra.mxu0 0.0
    %348 = vmatprep.subr.mxu0 0.0
    %349 = vmatpush1.xpose.msra.mxu0 0.0
    %350 = vmatprep.subr.mxu0 0.0
    %351 = vmatpush1.xpose.msra.mxu0 0.0
    %352 = vmatprep.subr.mxu0 0.0
    %353 = vmatpush1.xpose.msra.mxu0 0.0
    %354 = vmatprep.subr.mxu0 0.0
    %355 = vmatpush1.xpose.msra.mxu0 0.0
    %356 = vmatprep.subr.mxu0 0.0
    %357 = vmatpush1.xpose.msra.mxu0 0.0
    %358 = vmatprep.subr.mxu0 0.0
    %359 = vmatpush1.xpose.msra.mxu0 0.0
    %360 = vmatprep.subr.mxu0 0.0
    %361 = vmatpush1.xpose.msra.mxu0 0.0
    %362 = vmatprep.subr.mxu0 0.0
    %363 = vmatpush1.xpose.msra.mxu0 0.0
    %364 = vmatprep.subr.mxu0 0.0
    %365 = vmatpush1.xpose.msra.mxu0 0.0
    %366 = vmatprep.subr.mxu0 0.0
    %367 = vmatpush1.xpose.msra.mxu0 0.0
    %368 = vmatprep.subr.mxu0 0.0
    %369 = vmatpush1.xpose.msra.mxu0 0.0
    %370 = vmatprep.subr.mxu0 0.0
    %371 = vmatpush1.xpose.msra.mxu0 0.0
    %372 = vmatprep.subr.mxu0 0.0
    %373 = vmatpush1.xpose.msra.mxu0 0.0
    %374 = vmatprep.subr.mxu0 0.0
    %375 = vmatpush1.xpose.msra.mxu0 0.0
    %376 = vmatprep.subr.mxu0 0.0
    %377 = vmatpush1.xpose.msra.mxu0 0.0
    %378 = vmatprep.subr.mxu0 0.0
    %379 = vmatpush1.xpose.msra.mxu0 0.0
    %380 = vmatprep.subr.mxu0 0.0
    %381 = vmatpush1.xpose.msra.mxu0 0.0
    %382 = vmatprep.subr.mxu0 0.0
    %383 = vmatpush1.xpose.msra.mxu0 0.0
    %384 = vmatprep.subr.mxu0 0.0
    %385 = vmatpush1.xpose.msra.mxu0 0.0
    %386 = vmatprep.subr.mxu0 0.0
    %387 = vmatpush1.xpose.msra.mxu0 0.0
    %388 = vmatprep.subr.mxu0 0.0
    %389 = vmatpush1.xpose.msra.mxu0 0.0
    %390 = vmatprep.mubr.f32.mxu0 %v245
    %391 = vmatmul.mubr.f32.gmra.mrb[0].mxu0 %v244
    %v392 = vpop.f32.mrb[0].mxu0
    %v393 = vadd.f32 %v323, %v392
    %v394 = vpop.f32.mrb[0].mxu0
    %395 = vdwg.mxu0
    %396 = vmatprep.subr.mxu0 %v60
    %397 = vmatpush1.xpose.msra.mxu0 %v59
    %398 = vmatprep.subr.mxu0 0.0
    %399 = vmatpush1.xpose.msra.mxu0 0.0
    %400 = vmatprep.subr.mxu0 0.0
    %401 = vmatpush1.xpose.msra.mxu0 0.0
    %402 = vmatprep.subr.mxu0 0.0
    %403 = vmatpush1.xpose.msra.mxu0 0.0
    %404 = vmatprep.subr.mxu0 0.0
    %405 = vmatpush1.xpose.msra.mxu0 0.0
    %406 = vmatprep.subr.mxu0 0.0
    %407 = vmatpush1.xpose.msra.mxu0 0.0
    %408 = vmatprep.subr.mxu0 0.0
    %409 = vmatpush1.xpose.msra.mxu0 0.0
    %410 = vmatprep.subr.mxu0 0.0
    %411 = vmatpush1.xpose.msra.mxu0 0.0
    %412 = vmatprep.subr.mxu0 0.0
    %413 = vmatpush1.xpose.msra.mxu0 0.0
    %414 = vmatprep.subr.mxu0 0.0
    %415 = vmatpush1.xpose.msra.mxu0 0.0
    %416 = vmatprep.subr.mxu0 0.0
    %417 = vmatpush1.xpose.msra.mxu0 0.0
    %418 = vmatprep.subr.mxu0 0.0
    %419 = vmatpush1.xpose.msra.mxu0 0.0
    %420 = vmatprep.subr.mxu0 0.0
    %421 = vmatpush1.xpose.msra.mxu0 0.0
    %422 = vmatprep.subr.mxu0 0.0
    %423 = vmatpush1.xpose.msra.mxu0 0.0
    %424 = vmatprep.subr.mxu0 0.0
    %425 = vmatpush1.xpose.msra.mxu0 0.0
    %426 = vmatprep.subr.mxu0 0.0
    %427 = vmatpush1.xpose.msra.mxu0 0.0
    %428 = vmatprep.subr.mxu0 0.0
    %429 = vmatpush1.xpose.msra.mxu0 0.0
    %430 = vmatprep.subr.mxu0 0.0
    %431 = vmatpush1.xpose.msra.mxu0 0.0
    %432 = vmatprep.subr.mxu0 0.0
    %433 = vmatpush1.xpose.msra.mxu0 0.0
    %434 = vmatprep.subr.mxu0 0.0
    %435 = vmatpush1.xpose.msra.mxu0 0.0
    %436 = vmatprep.subr.mxu0 0.0
    %437 = vmatpush1.xpose.msra.mxu0 0.0
    %438 = vmatprep.subr.mxu0 0.0
    %439 = vmatpush1.xpose.msra.mxu0 0.0
    %440 = vmatprep.subr.mxu0 0.0
    %441 = vmatpush1.xpose.msra.mxu0 0.0
    %442 = vmatprep.subr.mxu0 0.0
    %443 = vmatpush1.xpose.msra.mxu0 0.0
    %444 = vmatprep.subr.mxu0 0.0
    %445 = vmatpush1.xpose.msra.mxu0 0.0
    %446 = vmatprep.subr.mxu0 0.0
    %447 = vmatpush1.xpose.msra.mxu0 0.0
    %448 = vmatprep.subr.mxu0 0.0
    %449 = vmatpush1.xpose.msra.mxu0 0.0
    %450 = vmatprep.subr.mxu0 0.0
    %451 = vmatpush1.xpose.msra.mxu0 0.0
    %452 = vmatprep.subr.mxu0 0.0
    %453 = vmatpush1.xpose.msra.mxu0 0.0
    %454 = vmatprep.subr.mxu0 0.0
    %455 = vmatpush1.xpose.msra.mxu0 0.0
    %456 = vmatprep.subr.mxu0 0.0
    %457 = vmatpush1.xpose.msra.mxu0 0.0
    %458 = vmatprep.subr.mxu0 0.0
    %459 = vmatpush1.xpose.msra.mxu0 0.0
    %460 = vmatprep.mubr.f32.mxu0 %v247
    %461 = vmatmul.mubr.f32.gmra.mrb[0].mxu0 %v246
    %v462 = vpop.f32.mrb[0].mxu0
    %v463 = vadd.f32 %v393, %v462
    %v464 = vpop.f32.mrb[0].mxu0
    %465 = vdwg.mxu0
    %466 = vmatprep.subr.mxu0 %v62
    %467 = vmatpush1.xpose.msra.mxu0 %v61
    %468 = vmatprep.subr.mxu0 0.0
    %469 = vmatpush1.xpose.msra.mxu0 0.0
    %470 = vmatprep.subr.mxu0 0.0
    %471 = vmatpush1.xpose.msra.mxu0 0.0
    %472 = vmatprep.subr.mxu0 0.0
    %473 = vmatpush1.xpose.msra.mxu0 0.0
    %474 = vmatprep.subr.mxu0 0.0
    %475 = vmatpush1.xpose.msra.mxu0 0.0
    %476 = vmatprep.subr.mxu0 0.0
    %477 = vmatpush1.xpose.msra.mxu0 0.0
    %478 = vmatprep.subr.mxu0 0.0
    %479 = vmatpush1.xpose.msra.mxu0 0.0
    %480 = vmatprep.subr.mxu0 0.0
    %481 = vmatpush1.xpose.msra.mxu0 0.0
    %482 = vmatprep.subr.mxu0 0.0
    %483 = vmatpush1.xpose.msra.mxu0 0.0
    %484 = vmatprep.subr.mxu0 0.0
    %485 = vmatpush1.xpose.msra.mxu0 0.0
    %486 = vmatprep.subr.mxu0 0.0
    %487 = vmatpush1.xpose.msra.mxu0 0.0
    %488 = vmatprep.subr.mxu0 0.0
    %489 = vmatpush1.xpose.msra.mxu0 0.0
    %490 = vmatprep.subr.mxu0 0.0
    %491 = vmatpush1.xpose.msra.mxu0 0.0
    %492 = vmatprep.subr.mxu0 0.0
    %493 = vmatpush1.xpose.msra.mxu0 0.0
    %494 = vmatprep.subr.mxu0 0.0
    %495 = vmatpush1.xpose.msra.mxu0 0.0
    %496 = vmatprep.subr.mxu0 0.0
    %497 = vmatpush1.xpose.msra.mxu0 0.0
    %498 = vmatprep.subr.mxu0 0.0
    %499 = vmatpush1.xpose.msra.mxu0 0.0
    %500 = vmatprep.subr.mxu0 0.0
    %501 = vmatpush1.xpose.msra.mxu0 0.0
    %502 = vmatprep.subr.mxu0 0.0
    %503 = vmatpush1.xpose.msra.mxu0 0.0
    %504 = vmatprep.subr.mxu0 0.0
    %505 = vmatpush1.xpose.msra.mxu0 0.0
    %506 = vmatprep.subr.mxu0 0.0
    %507 = vmatpush1.xpose.msra.mxu0 0.0
    %508 = vmatprep.subr.mxu0 0.0
    %509 = vmatpush1.xpose.msra.mxu0 0.0
    %510 = vmatprep.subr.mxu0 0.0
    %511 = vmatpush1.xpose.msra.mxu0 0.0
    %512 = vmatprep.subr.mxu0 0.0
    %513 = vmatpush1.xpose.msra.mxu0 0.0
    %514 = vmatprep.subr.mxu0 0.0
    %515 = vmatpush1.xpose.msra.mxu0 0.0
    %516 = vmatprep.subr.mxu0 0.0
    %517 = vmatpush1.xpose.msra.mxu0 0.0
    %518 = vmatprep.subr.mxu0 0.0
    %519 = vmatpush1.xpose.msra.mxu0 0.0
    %520 = vmatprep.subr.mxu0 0.0
    %521 = vmatpush1.xpose.msra.mxu0 0.0
    %522 = vmatprep.subr.mxu0 0.0
    %523 = vmatpush1.xpose.msra.mxu0 0.0
    %524 = vmatprep.subr.mxu0 0.0
    %525 = vmatpush1.xpose.msra.mxu0 0.0
    %526 = vmatprep.subr.mxu0 0.0
    %527 = vmatpush1.xpose.msra.mxu0 0.0
    %528 = vmatprep.subr.mxu0 0.0
    %529 = vmatpush1.xpose.msra.mxu0 0.0
    %530 = vmatprep.mubr.f32.mxu0 %v249
    %531 = vmatmul.mubr.f32.gmra.mrb[0].mxu0 %v248
    %v532 = vpop.f32.mrb[0].mxu0
    %v533 = vadd.f32 %v463, %v532
    %v534 = vpop.f32.mrb[0].mxu0
    %535 = vdwg.mxu0
    %vm536 = vcmask 58368
    %v537 = vsel %vm536, %v533, -inf
    %538 = vmax.xlane.f32.xlu0 %v537
    %v539 = vpop.xlane.xlu0 %538
    %v540 = vsub.f32 %v533, %v539
    %v541 = vmul.f32 %v540, 1.442695
    %v542 = vpow.pop %v541
    %v543 = vsel %vm536, %v542, 0.0
    %544 = vadd.xlane.f32.xlu0 %v543
    %v545 = vpop.xlane.xlu0 %544
    %v546 = vrcp.pop %v545
    %v547 = vmul.f32 %v542, %v546
    %v548 = vlog2.pop %v545
    %v549 = vmul.f32 %v548, 0.6931472
    %v550 = vsub.f32 %v540, %v549
    %vm551 = vcmask 60418
    %v552 = vsel %vm551, %v533, -inf
    %553 = vmax.xlane.f32.xlu0 %v552
    %v554 = vpop.xlane.xlu0 %553
    %v555 = vsub.f32 %v533, %v554
    %v556 = vmul.f32 %v555, 1.442695
    %v557 = vpow.pop %v556
    %v558 = vsel %vm551, %v557, 0.0
    %559 = vadd.xlane.f32.xlu0 %v558
    %v560 = vpop.xlane.xlu0 %559
    %v561 = vrcp.pop %v560
    %v562 = vmul.f32 %v557, %v561
    %v564 = vrot.slane %v547, 6
    %v566 = vsub.f32 %v562, %v564
    %v568 = vrot.slane %v566, 2
    %vm569 = vcmask 64512
    %v570 = vsel %vm569, %v568, 0
    %572 = vmatprep.subr.mxu0 %v56
    %573 = vmatpush1.msra.mxu0 %v55
    %574 = vmatprep.subr.mxu0 0.0
    %575 = vmatpush1.msra.mxu0 0.0
    %576 = vmatprep.subr.mxu0 0.0
    %577 = vmatpush1.msra.mxu0 0.0
    %578 = vmatprep.subr.mxu0 0.0
    %579 = vmatpush1.msra.mxu0 0.0
    %580 = vmatprep.subr.mxu0 0.0
    %581 = vmatpush1.msra.mxu0 0.0
    %582 = vmatprep.subr.mxu0 0.0
    %583 = vmatpush1.msra.mxu0 0.0
    %584 = vmatprep.subr.mxu0 0.0
    %585 = vmatpush1.msra.mxu0 0.0
    %586 = vmatprep.subr.mxu0 0.0
    %587 = vmatpush1.msra.mxu0 0.0
    %588 = vmatprep.subr.mxu0 0.0
    %589 = vmatpush1.msra.mxu0 0.0
    %590 = vmatprep.subr.mxu0 0.0
    %591 = vmatpush1.msra.mxu0 0.0
    %592 = vmatprep.subr.mxu0 0.0
    %593 = vmatpush1.msra.mxu0 0.0
    %594 = vmatprep.subr.mxu0 0.0
    %595 = vmatpush1.msra.mxu0 0.0
    %596 = vmatprep.subr.mxu0 0.0
    %597 = vmatpush1.msra.mxu0 0.0
    %598 = vmatprep.subr.mxu0 0.0
    %599 = vmatpush1.msra.mxu0 0.0
    %600 = vmatprep.subr.mxu0 0.0
    %601 = vmatpush1.msra.mxu0 0.0
    %602 = vmatprep.subr.mxu0 0.0
    %603 = vmatpush1.msra.mxu0 0.0
    %604 = vmatprep.subr.mxu0 0.0
    %605 = vmatpush1.msra.mxu0 0.0
    %606 = vmatprep.subr.mxu0 0.0
    %607 = vmatpush1.msra.mxu0 0.0
    %608 = vmatprep.subr.mxu0 0.0
    %609 = vmatpush1.msra.mxu0 0.0
    %610 = vmatprep.subr.mxu0 0.0
    %611 = vmatpush1.msra.mxu0 0.0
    %612 = vmatprep.subr.mxu0 0.0
    %613 = vmatpush1.msra.mxu0 0.0
    %614 = vmatprep.subr.mxu0 0.0
    %615 = vmatpush1.msra.mxu0 0.0
    %616 = vmatprep.subr.mxu0 0.0
    %617 = vmatpush1.msra.mxu0 0.0
    %618 = vmatprep.subr.mxu0 0.0
    %619 = vmatpush1.msra.mxu0 0.0
    %620 = vmatprep.subr.mxu0 0.0
    %621 = vmatpush1.msra.mxu0 0.0
    %622 = vmatprep.subr.mxu0 0.0
    %623 = vmatpush1.msra.mxu0 0.0
    %624 = vmatprep.subr.mxu0 0.0
    %625 = vmatpush1.msra.mxu0 0.0
    %626 = vmatprep.subr.mxu0 0.0
    %627 = vmatpush1.msra.mxu0 0.0
    %628 = vmatprep.subr.mxu0 0.0
    %629 = vmatpush1.msra.mxu0 0.0
    %630 = vmatprep.subr.mxu0 0.0
    %631 = vmatpush1.msra.mxu0 0.0
    %632 = vmatprep.subr.mxu0 0.0
    %633 = vmatpush1.msra.mxu0 0.0
    %634 = vmatprep.subr.mxu0 0.0
    %635 = vmatpush1.msra.mxu0 0.0
    %636 = vmatprep.mubr.f32.mxu0 0.0
    %637 = vmatmul.mubr.f32.gmra.mrb[0].mxu0 %v570
    %v638 = vpop.f32.mrb[0].mxu0
    %v639 = vadd.f32 0.0, %v638
    %v640 = vpop.f32.mrb[0].mxu0
    %v641 = vadd.f32 0.0, %v640
    %642 = vdwg.mxu0
    %643 = vmatprep.subr.mxu0 %v58
    %644 = vmatpush1.msra.mxu0 %v57
    %645 = vmatprep.subr.mxu0 0.0
    %646 = vmatpush1.msra.mxu0 0.0
    %647 = vmatprep.subr.mxu0 0.0
    %648 = vmatpush1.msra.mxu0 0.0
    %649 = vmatprep.subr.mxu0 0.0
    %650 = vmatpush1.msra.mxu0 0.0
    %651 = vmatprep.subr.mxu0 0.0
    %652 = vmatpush1.msra.mxu0 0.0
    %653 = vmatprep.subr.mxu0 0.0
    %654 = vmatpush1.msra.mxu0 0.0
    %655 = vmatprep.subr.mxu0 0.0
    %656 = vmatpush1.msra.mxu0 0.0
    %657 = vmatprep.subr.mxu0 0.0
    %658 = vmatpush1.msra.mxu0 0.0
    %659 = vmatprep.subr.mxu0 0.0
    %660 = vmatpush1.msra.mxu0 0.0
    %661 = vmatprep.subr.mxu0 0.0
    %662 = vmatpush1.msra.mxu0 0.0
    %663 = vmatprep.subr.mxu0 0.0
    %664 = vmatpush1.msra.mxu0 0.0
    %665 = vmatprep.subr.mxu0 0.0
    %666 = vmatpush1.msra.mxu0 0.0
    %667 = vmatprep.subr.mxu0 0.0
    %668 = vmatpush1.msra.mxu0 0.0
    %669 = vmatprep.subr.mxu0 0.0
    %670 = vmatpush1.msra.mxu0 0.0
    %671 = vmatprep.subr.mxu0 0.0
    %672 = vmatpush1.msra.mxu0 0.0
    %673 = vmatprep.subr.mxu0 0.0
    %674 = vmatpush1.msra.mxu0 0.0
    %675 = vmatprep.subr.mxu0 0.0
    %676 = vmatpush1.msra.mxu0 0.0
    %677 = vmatprep.subr.mxu0 0.0
    %678 = vmatpush1.msra.mxu0 0.0
    %679 = vmatprep.subr.mxu0 0.0
    %680 = vmatpush1.msra.mxu0 0.0
    %681 = vmatprep.subr.mxu0 0.0
    %682 = vmatpush1.msra.mxu0 0.0
    %683 = vmatprep.subr.mxu0 0.0
    %684 = vmatpush1.msra.mxu0 0.0
    %685 = vmatprep.subr.mxu0 0.0
    %686 = vmatpush1.msra.mxu0 0.0
    %687 = vmatprep.subr.mxu0 0.0
    %688 = vmatpush1.msra.mxu0 0.0
    %689 = vmatprep.subr.mxu0 0.0
    %690 = vmatpush1.msra.mxu0 0.0
    %691 = vmatprep.subr.mxu0 0.0
    %692 = vmatpush1.msra.mxu0 0.0
    %693 = vmatprep.subr.mxu0 0.0
    %694 = vmatpush1.msra.mxu0 0.0
    %695 = vmatprep.subr.mxu0 0.0
    %696 = vmatpush1.msra.mxu0 0.0
    %697 = vmatprep.subr.mxu0 0.0
    %698 = vmatpush1.msra.mxu0 0.0
    %699 = vmatprep.subr.mxu0 0.0
    %700 = vmatpush1.msra.mxu0 0.0
    %701 = vmatprep.subr.mxu0 0.0
    %702 = vmatpush1.msra.mxu0 0.0
    %703 = vmatprep.subr.mxu0 0.0
    %704 = vmatpush1.msra.mxu0 0.0
    %705 = vmatprep.subr.mxu0 0.0
    %706 = vmatpush1.msra.mxu0 0.0
    %707 = vmatprep.mubr.f32.mxu0 0.0
    %708 = vmatmul.mubr.f32.gmra.mrb[0].mxu0 %v570
    %v709 = vpop.f32.mrb[0].mxu0
    %v710 = vadd.f32 0.0, %v709
    %v711 = vpop.f32.mrb[0].mxu0
    %v712 = vadd.f32 0.0, %v711
    %713 = vdwg.mxu0
    %714 = vmatprep.subr.mxu0 %v60
    %715 = vmatpush1.msra.mxu0 %v59
    %716 = vmatprep.subr.mxu0 0.0
    %717 = vmatpush1.msra.mxu0 0.0
    %718 = vmatprep.subr.mxu0 0.0
    %719 = vmatpush1.msra.mxu0 0.0
    %720 = vmatprep.subr.mxu0 0.0
    %721 = vmatpush1.msra.mxu0 0.0
    %722 = vmatprep.subr.mxu0 0.0
    %723 = vmatpush1.msra.mxu0 0.0
    %724 = vmatprep.subr.mxu0 0.0
    %725 = vmatpush1.msra.mxu0 0.0
    %726 = vmatprep.subr.mxu0 0.0
    %727 = vmatpush1.msra.mxu0 0.0
    %728 = vmatprep.subr.mxu0 0.0
    %729 = vmatpush1.msra.mxu0 0.0
    %730 = vmatprep.subr.mxu0 0.0
    %731 = vmatpush1.msra.mxu0 0.0
    %732 = vmatprep.subr.mxu0 0.0
    %733 = vmatpush1.msra.mxu0 0.0
    %734 = vmatprep.subr.mxu0 0.0
    %735 = vmatpush1.msra.mxu0 0.0
    %736 = vmatprep.subr.mxu0 0.0
    %737 = vmatpush1.msra.mxu0 0.0
    %738 = vmatprep.subr.mxu0 0.0
    %739 = vmatpush1.msra.mxu0 0.0
    %740 = vmatprep.subr.mxu0 0.0
    %741 = vmatpush1.msra.mxu0 0.0
    %742 = vmatprep.subr.mxu0 0.0
    %743 = vmatpush1.msra.mxu0 0.0
    %744 = vmatprep.subr.mxu0 0.0
    %745 = vmatpush1.msra.mxu0 0.0
    %746 = vmatprep.subr.mxu0 0.0
    %747 = vmatpush1.msra.mxu0 0.0
    %748 = vmatprep.subr.mxu0 0.0
    %749 = vmatpush1.msra.mxu0 0.0
    %750 = vmatprep.subr.mxu0 0.0
    %751 = vmatpush1.msra.mxu0 0.0
    %752 = vmatprep.subr.mxu0 0.0
    %753 = vmatpush1.msra.mxu0 0.0
    %754 = vmatprep.subr.mxu0 0.0
    %755 = vmatpush1.msra.mxu0 0.0
    %756 = vmatprep.subr.mxu0 0.0
    %757 = vmatpush1.msra.mxu0 0.0
    %758 = vmatprep.subr.mxu0 0.0
    %759 = vmatpush1.msra.mxu0 0.0
    %760 = vmatprep.subr.mxu0 0.0
    %761 = vmatpush1.msra.mxu0 0.0
    %762 = vmatprep.subr.mxu0 0.0
    %763 = vmatpush1.msra.mxu0 0.0
    %764 = vmatprep.subr.mxu0 0.0
    %765 = vmatpush1.msra.mxu0 0.0
    %766 = vmatprep.subr.mxu0 0.0
    %767 = vmatpush1.msra.mxu0 0.0
    %768 = vmatprep.subr.mxu0 0.0
    %769 = vmatpush1.msra.mxu0 0.0
    %770 = vmatprep.subr.mxu0 0.0
    %771 = vmatpush1.msra.mxu0 0.0
    %772 = vmatprep.subr.mxu0 0.0
    %773 = vmatpush1.msra.mxu0 0.0
    %774 = vmatprep.subr.mxu0 0.0
    %775 = vmatpush1.msra.mxu0 0.0
    %776 = vmatprep.subr.mxu0 0.0
    %777 = vmatpush1.msra.mxu0 0.0
    %778 = vmatprep.mubr.f32.mxu0 0.0
    %779 = vmatmul.mubr.f32.gmra.mrb[0].mxu0 %v570
    %v780 = vpop.f32.mrb[0].mxu0
    %v781 = vadd.f32 0.0, %v780
    %v782 = vpop.f32.mrb[0].mxu0
    %v783 = vadd.f32 0.0, %v782
    %784 = vdwg.mxu0
    %785 = vmatprep.subr.mxu0 %v62
    %786 = vmatpush1.msra.mxu0 %v61
    %787 = vmatprep.subr.mxu0 0.0
    %788 = vmatpush1.msra.mxu0 0.0
    %789 = vmatprep.subr.mxu0 0.0
    %790 = vmatpush1.msra.mxu0 0.0
    %791 = vmatprep.subr.mxu0 0.0
    %792 = vmatpush1.msra.mxu0 0.0
    %793 = vmatprep.subr.mxu0 0.0
    %794 = vmatpush1.msra.mxu0 0.0
    %795 = vmatprep.subr.mxu0 0.0
    %796 = vmatpush1.msra.mxu0 0.0
    %797 = vmatprep.subr.mxu0 0.0
    %798 = vmatpush1.msra.mxu0 0.0
    %799 = vmatprep.subr.mxu0 0.0
    %800 = vmatpush1.msra.mxu0 0.0
    %801 = vmatprep.subr.mxu0 0.0
    %802 = vmatpush1.msra.mxu0 0.0
    %803 = vmatprep.subr.mxu0 0.0
    %804 = vmatpush1.msra.mxu0 0.0
    %805 = vmatprep.subr.mxu0 0.0
    %806 = vmatpush1.msra.mxu0 0.0
    %807 = vmatprep.subr.mxu0 0.0
    %808 = vmatpush1.msra.mxu0 0.0
    %809 = vmatprep.subr.mxu0 0.0
    %810 = vmatpush1.msra.mxu0 0.0
    %811 = vmatprep.subr.mxu0 0.0
    %812 = vmatpush1.msra.mxu0 0.0
    %813 = vmatprep.subr.mxu0 0.0
    %814 = vmatpush1.msra.mxu0 0.0
    %815 = vmatprep.subr.mxu0 0.0
    %816 = vmatpush1.msra.mxu0 0.0
    %817 = vmatprep.subr.mxu0 0.0
    %818 = vmatpush1.msra.mxu0 0.0
    %819 = vmatprep.subr.mxu0 0.0
    %820 = vmatpush1.msra.mxu0 0.0
    %821 = vmatprep.subr.mxu0 0.0
    %822 = vmatpush1.msra.mxu0 0.0
    %823 = vmatprep.subr.mxu0 0.0
    %824 = vmatpush1.msra.mxu0 0.0
    %825 = vmatprep.subr.mxu0 0.0
    %826 = vmatpush1.msra.mxu0 0.0
    %827 = vmatprep.subr.mxu0 0.0
    %828 = vmatpush1.msra.mxu0 0.0
    %829 = vmatprep.subr.mxu0 0.0
    %830 = vmatpush1.msra.mxu0 0.0
    %831 = vmatprep.subr.mxu0 0.0
    %832 = vmatpush1.msra.mxu0 0.0
    %833 = vmatprep.subr.mxu0 0.0
    %834 = vmatpush1.msra.mxu0 0.0
    %835 = vmatprep.subr.mxu0 0.0
    %836 = vmatpush1.msra.mxu0 0.0
    %837 = vmatprep.subr.mxu0 0.0
    %838 = vmatpush1.msra.mxu0 0.0
    %839 = vmatprep.subr.mxu0 0.0
    %840 = vmatpush1.msra.mxu0 0.0
    %841 = vmatprep.subr.mxu0 0.0
    %842 = vmatpush1.msra.mxu0 0.0
    %843 = vmatprep.subr.mxu0 0.0
    %844 = vmatpush1.msra.mxu0 0.0
    %845 = vmatprep.subr.mxu0 0.0
    %846 = vmatpush1.msra.mxu0 0.0
    %847 = vmatprep.subr.mxu0 0.0
    %848 = vmatpush1.msra.mxu0 0.0
    %849 = vmatprep.mubr.f32.mxu0 0.0
    %850 = vmatmul.mubr.f32.gmra.mrb[0].mxu0 %v570
    %v851 = vpop.f32.mrb[0].mxu0
    %v852 = vadd.f32 0.0, %v851
    %v853 = vpop.f32.mrb[0].mxu0
    %v854 = vadd.f32 0.0, %v853
    %855 = vdwg.mxu0
    %v856 = vmul.f32 %v639, %v639
    %v857 = vmul.f32 %v641, %v641
    %v858 = vmul.f32 %v710, %v710
    %v859 = vmul.f32 %v712, %v712
    %v860 = vmul.f32 %v781, %v781
    %v861 = vmul.f32 %v783, %v783
    %v862 = vmul.f32 %v852, %v852
    %v863 = vmul.f32 %v854, %v854
    %v864 = vsel %vm112, %v856, 0.0
    %v865 = vsel %vm112, %v857, 0.0
    %v866 = vadd.f32 %v864, %v865
    %v867 = vsel %vm112, %v858, 0.0
    %v868 = vadd.f32 %v866, %v867
    %v869 = vsel %vm112, %v859, 0.0
    %v870 = vadd.f32 %v868, %v869
    %v871 = vsel %vm112, %v860, 0.0
    %v872 = vadd.f32 %v870, %v871
    %v873 = vsel %vm112, %v861, 0.0
    %v874 = vadd.f32 %v872, %v873
    %v875 = vsel %vm112, %v862, 0.0
    %v876 = vadd.f32 %v874, %v875
    %v877 = vsel %vm112, %v863, 0.0
    %v878 = vadd.f32 %v876, %v877
    %879 = vadd.xlane.f32.xlu0 %v878
    %v880 = vpop.xlane.xlu0 %879
    %v881 = vrsqrt.pop %v880
    %v882 = vmul.f32 %v880, %v881
    %vm883 = vcmp.eq.f32.partialorder %v880, inf
    %v884 = vsel %vm883, %v880, %v882
    %vm885 = vcmp.eq.f32.partialorder %v880, 0.0
    %v886 = vand.u32 %v880, 2147483648
    %v887 = vsel %vm885, %v886, %v884
    %v888 = vadd.f32 %v887, 1e-08
    %v889 = vrcp.pop %v888
    %v890 = vmul.f32 %v639, %v889
    %v891 = vmul.f32 %v641, %v889
    %v892 = vmul.f32 %v710, %v889
    %v893 = vmul.f32 %v712, %v889
    %v894 = vmul.f32 %v781, %v889
    %v895 = vmul.f32 %v783, %v889
    %v896 = vmul.f32 %v852, %v889
    %v897 = vmul.f32 %v854, %v889
    %v906 = vcombine.low %v890, %v891
    %v907 = vcombine.low %v892, %v893
    %v909 = vunpack.c.l.s4 1983009808
    %v910 = vunpack.c.0.s8 %v909
    %v911 = vlaneseq
    %v912 = vshrl.u32 %v911, 7
    %v913 = vsub.s32 %v910, %v912
    %v914 = vrot.slane %v906, %v913
    %v916 = vunpack.c.l.s4 1983009808
    %v917 = vunpack.c.0.s8 %v916
    %v918 = vlaneseq
    %v919 = vshrl.u32 %v918, 7
    %v920 = vsub.s32 %v917, %v919
    %v921 = vrot.slane %v907, %v920
    %v922 = vcombine.low %v914, %v921
    %v923 = vcombine.low %v894, %v895
    %v924 = vcombine.low %v896, %v897
    %v926 = vunpack.c.l.s4 1983009808
    %v927 = vunpack.c.0.s8 %v926
    %v928 = vlaneseq
    %v929 = vshrl.u32 %v928, 7
    %v930 = vsub.s32 %v927, %v929
    %v931 = vrot.slane %v923, %v930
    %v933 = vunpack.c.l.s4 1983009808
    %v934 = vunpack.c.0.s8 %v933
    %v935 = vlaneseq
    %v936 = vshrl.u32 %v935, 7
    %v937 = vsub.s32 %v934, %v936
    %v938 = vrot.slane %v924, %v937
    %v939 = vcombine.low %v931, %v938
    %v942 = vadd.f32 %v53, %v922
    %v943 = vadd.f32 %v54, %v939
    %v946 = vcombine.high %v942, %v942
    %v948 = vunpack.c.l.s4 1983009808
    %v949 = vunpack.c.0.s8 %v948
    %v950 = vlaneseq
    %v951 = vshrl.u32 %v950, 7
    %v952 = vsub.s32 %v949, %v951
    %v953 = vrot.slane %v942, %v952
    %v955 = vunpack.c.l.s4 1983009808
    %v956 = vunpack.c.0.s8 %v955
    %v957 = vlaneseq
    %v958 = vshrl.u32 %v957, 7
    %v959 = vsub.s32 %v956, %v958
    %v960 = vrot.slane %v946, %v959
    %v961 = vcombine.high %v953, %v953
    %v962 = vcombine.high %v960, %v960
    %v963 = vcombine.high %v943, %v943
    %v965 = vunpack.c.l.s4 1983009808
    %v966 = vunpack.c.0.s8 %v965
    %v967 = vlaneseq
    %v968 = vshrl.u32 %v967, 7
    %v969 = vsub.s32 %v966, %v968
    %v970 = vrot.slane %v943, %v969
    %v972 = vunpack.c.l.s4 1983009808
    %v973 = vunpack.c.0.s8 %v972
    %v974 = vlaneseq
    %v975 = vshrl.u32 %v974, 7
    %v976 = vsub.s32 %v973, %v975
    %v977 = vrot.slane %v963, %v976
    %v978 = vcombine.high %v970, %v970
    %v979 = vcombine.high %v977, %v977
    %988 = vmatprep.subr.mxu0 %v56
    %989 = vmatpush1.xpose.msra.mxu0 %v55
    %990 = vmatprep.subr.mxu0 0.0
    %991 = vmatpush1.xpose.msra.mxu0 0.0
    %992 = vmatprep.subr.mxu0 0.0
    %993 = vmatpush1.xpose.msra.mxu0 0.0
    %994 = vmatprep.subr.mxu0 0.0
    %995 = vmatpush1.xpose.msra.mxu0 0.0
    %996 = vmatprep.subr.mxu0 0.0
    %997 = vmatpush1.xpose.msra.mxu0 0.0
    %998 = vmatprep.subr.mxu0 0.0
    %999 = vmatpush1.xpose.msra.mxu0 0.0
    %1000 = vmatprep.subr.mxu0 0.0
    %1001 = vmatpush1.xpose.msra.mxu0 0.0
    %1002 = vmatprep.subr.mxu0 0.0
    %1003 = vmatpush1.xpose.msra.mxu0 0.0
    %1004 = vmatprep.subr.mxu0 0.0
    %1005 = vmatpush1.xpose.msra.mxu0 0.0
    %1006 = vmatprep.subr.mxu0 0.0
    %1007 = vmatpush1.xpose.msra.mxu0 0.0
    %1008 = vmatprep.subr.mxu0 0.0
    %1009 = vmatpush1.xpose.msra.mxu0 0.0
    %1010 = vmatprep.subr.mxu0 0.0
    %1011 = vmatpush1.xpose.msra.mxu0 0.0
    %1012 = vmatprep.subr.mxu0 0.0
    %1013 = vmatpush1.xpose.msra.mxu0 0.0
    %1014 = vmatprep.subr.mxu0 0.0
    %1015 = vmatpush1.xpose.msra.mxu0 0.0
    %1016 = vmatprep.subr.mxu0 0.0
    %1017 = vmatpush1.xpose.msra.mxu0 0.0
    %1018 = vmatprep.subr.mxu0 0.0
    %1019 = vmatpush1.xpose.msra.mxu0 0.0
    %1020 = vmatprep.subr.mxu0 0.0
    %1021 = vmatpush1.xpose.msra.mxu0 0.0
    %1022 = vmatprep.subr.mxu0 0.0
    %1023 = vmatpush1.xpose.msra.mxu0 0.0
    %1024 = vmatprep.subr.mxu0 0.0
    %1025 = vmatpush1.xpose.msra.mxu0 0.0
    %1026 = vmatprep.subr.mxu0 0.0
    %1027 = vmatpush1.xpose.msra.mxu0 0.0
    %1028 = vmatprep.subr.mxu0 0.0
    %1029 = vmatpush1.xpose.msra.mxu0 0.0
    %1030 = vmatprep.subr.mxu0 0.0
    %1031 = vmatpush1.xpose.msra.mxu0 0.0
    %1032 = vmatprep.subr.mxu0 0.0
    %1033 = vmatpush1.xpose.msra.mxu0 0.0
    %1034 = vmatprep.subr.mxu0 0.0
    %1035 = vmatpush1.xpose.msra.mxu0 0.0
    %1036 = vmatprep.subr.mxu0 0.0
    %1037 = vmatpush1.xpose.msra.mxu0 0.0
    %1038 = vmatprep.subr.mxu0 0.0
    %1039 = vmatpush1.xpose.msra.mxu0 0.0
    %1040 = vmatprep.subr.mxu0 0.0
    %1041 = vmatpush1.xpose.msra.mxu0 0.0
    %1042 = vmatprep.subr.mxu0 0.0
    %1043 = vmatpush1.xpose.msra.mxu0 0.0
    %1044 = vmatprep.subr.mxu0 0.0
    %1045 = vmatpush1.xpose.msra.mxu0 0.0
    %1046 = vmatprep.subr.mxu0 0.0
    %1047 = vmatpush1.xpose.msra.mxu0 0.0
    %1048 = vmatprep.subr.mxu0 0.0
    %1049 = vmatpush1.xpose.msra.mxu0 0.0
    %1050 = vmatprep.subr.mxu0 0.0
    %1051 = vmatpush1.xpose.msra.mxu0 0.0
    %1052 = vmatprep.mubr.f32.mxu0 %v961
    %1053 = vmatmul.mubr.f32.gmra.mrb[0].mxu0 %v953
    %v1054 = vpop.f32.mrb[0].mxu0
    %v1055 = vadd.f32 %v254, %v1054
    %v1056 = vpop.f32.mrb[0].mxu0
    %1057 = vdwg.mxu0
    %1058 = vmatprep.subr.mxu0 %v58
    %1059 = vmatpush1.xpose.msra.mxu0 %v57
    %1060 = vmatprep.subr.mxu0 0.0
    %1061 = vmatpush1.xpose.msra.mxu0 0.0
    %1062 = vmatprep.subr.mxu0 0.0
    %1063 = vmatpush1.xpose.msra.mxu0 0.0
    %1064 = vmatprep.subr.mxu0 0.0
    %1065 = vmatpush1.xpose.msra.mxu0 0.0
    %1066 = vmatprep.subr.mxu0 0.0
    %1067 = vmatpush1.xpose.msra.mxu0 0.0
    %1068 = vmatprep.subr.mxu0 0.0
    %1069 = vmatpush1.xpose.msra.mxu0 0.0
    %1070 = vmatprep.subr.mxu0 0.0
    %1071 = vmatpush1.xpose.msra.mxu0 0.0
    %1072 = vmatprep.subr.mxu0 0.0
    %1073 = vmatpush1.xpose.msra.mxu0 0.0
    %1074 = vmatprep.subr.mxu0 0.0
    %1075 = vmatpush1.xpose.msra.mxu0 0.0
    %1076 = vmatprep.subr.mxu0 0.0
    %1077 = vmatpush1.xpose.msra.mxu0 0.0
    %1078 = vmatprep.subr.mxu0 0.0
    %1079 = vmatpush1.xpose.msra.mxu0 0.0
    %1080 = vmatprep.subr.mxu0 0.0
    %1081 = vmatpush1.xpose.msra.mxu0 0.0
    %1082 = vmatprep.subr.mxu0 0.0
    %1083 = vmatpush1.xpose.msra.mxu0 0.0
    %1084 = vmatprep.subr.mxu0 0.0
    %1085 = vmatpush1.xpose.msra.mxu0 0.0
    %1086 = vmatprep.subr.mxu0 0.0
    %1087 = vmatpush1.xpose.msra.mxu0 0.0
    %1088 = vmatprep.subr.mxu0 0.0
    %1089 = vmatpush1.xpose.msra.mxu0 0.0
    %1090 = vmatprep.subr.mxu0 0.0
    %1091 = vmatpush1.xpose.msra.mxu0 0.0
    %1092 = vmatprep.subr.mxu0 0.0
    %1093 = vmatpush1.xpose.msra.mxu0 0.0
    %1094 = vmatprep.subr.mxu0 0.0
    %1095 = vmatpush1.xpose.msra.mxu0 0.0
    %1096 = vmatprep.subr.mxu0 0.0
    %1097 = vmatpush1.xpose.msra.mxu0 0.0
    %1098 = vmatprep.subr.mxu0 0.0
    %1099 = vmatpush1.xpose.msra.mxu0 0.0
    %1100 = vmatprep.subr.mxu0 0.0
    %1101 = vmatpush1.xpose.msra.mxu0 0.0
    %1102 = vmatprep.subr.mxu0 0.0
    %1103 = vmatpush1.xpose.msra.mxu0 0.0
    %1104 = vmatprep.subr.mxu0 0.0
    %1105 = vmatpush1.xpose.msra.mxu0 0.0
    %1106 = vmatprep.subr.mxu0 0.0
    %1107 = vmatpush1.xpose.msra.mxu0 0.0
    %1108 = vmatprep.subr.mxu0 0.0
    %1109 = vmatpush1.xpose.msra.mxu0 0.0
    %1110 = vmatprep.subr.mxu0 0.0
    %1111 = vmatpush1.xpose.msra.mxu0 0.0
    %1112 = vmatprep.subr.mxu0 0.0
    %1113 = vmatpush1.xpose.msra.mxu0 0.0
    %1114 = vmatprep.subr.mxu0 0.0
    %1115 = vmatpush1.xpose.msra.mxu0 0.0
    %1116 = vmatprep.subr.mxu0 0.0
    %1117 = vmatpush1.xpose.msra.mxu0 0.0
    %1118 = vmatprep.subr.mxu0 0.0
    %1119 = vmatpush1.xpose.msra.mxu0 0.0
    %1120 = vmatprep.subr.mxu0 0.0
    %1121 = vmatpush1.xpose.msra.mxu0 0.0
    %1122 = vmatprep.mubr.f32.mxu0 %v962
    %1123 = vmatmul.mubr.f32.gmra.mrb[0].mxu0 %v960
    %v1124 = vpop.f32.mrb[0].mxu0
    %v1125 = vadd.f32 %v1055, %v1124
    %v1126 = vpop.f32.mrb[0].mxu0
    %1127 = vdwg.mxu0
    %1128 = vmatprep.subr.mxu0 %v60
    %1129 = vmatpush1.xpose.msra.mxu0 %v59
    %1130 = vmatprep.subr.mxu0 0.0
    %1131 = vmatpush1.xpose.msra.mxu0 0.0
    %1132 = vmatprep.subr.mxu0 0.0
    %1133 = vmatpush1.xpose.msra.mxu0 0.0
    %1134 = vmatprep.subr.mxu0 0.0
    %1135 = vmatpush1.xpose.msra.mxu0 0.0
    %1136 = vmatprep.subr.mxu0 0.0
    %1137 = vmatpush1.xpose.msra.mxu0 0.0
    %1138 = vmatprep.subr.mxu0 0.0
    %1139 = vmatpush1.xpose.msra.mxu0 0.0
    %1140 = vmatprep.subr.mxu0 0.0
    %1141 = vmatpush1.xpose.msra.mxu0 0.0
    %1142 = vmatprep.subr.mxu0 0.0
    %1143 = vmatpush1.xpose.msra.mxu0 0.0
    %1144 = vmatprep.subr.mxu0 0.0
    %1145 = vmatpush1.xpose.msra.mxu0 0.0
    %1146 = vmatprep.subr.mxu0 0.0
    %1147 = vmatpush1.xpose.msra.mxu0 0.0
    %1148 = vmatprep.subr.mxu0 0.0
    %1149 = vmatpush1.xpose.msra.mxu0 0.0
    %1150 = vmatprep.subr.mxu0 0.0
    %1151 = vmatpush1.xpose.msra.mxu0 0.0
    %1152 = vmatprep.subr.mxu0 0.0
    %1153 = vmatpush1.xpose.msra.mxu0 0.0
    %1154 = vmatprep.subr.mxu0 0.0
    %1155 = vmatpush1.xpose.msra.mxu0 0.0
    %1156 = vmatprep.subr.mxu0 0.0
    %1157 = vmatpush1.xpose.msra.mxu0 0.0
    %1158 = vmatprep.subr.mxu0 0.0
    %1159 = vmatpush1.xpose.msra.mxu0 0.0
    %1160 = vmatprep.subr.mxu0 0.0
    %1161 = vmatpush1.xpose.msra.mxu0 0.0
    %1162 = vmatprep.subr.mxu0 0.0
    %1163 = vmatpush1.xpose.msra.mxu0 0.0
    %1164 = vmatprep.subr.mxu0 0.0
    %1165 = vmatpush1.xpose.msra.mxu0 0.0
    %1166 = vmatprep.subr.mxu0 0.0
    %1167 = vmatpush1.xpose.msra.mxu0 0.0
    %1168 = vmatprep.subr.mxu0 0.0
    %1169 = vmatpush1.xpose.msra.mxu0 0.0
    %1170 = vmatprep.subr.mxu0 0.0
    %1171 = vmatpush1.xpose.msra.mxu0 0.0
    %1172 = vmatprep.subr.mxu0 0.0
    %1173 = vmatpush1.xpose.msra.mxu0 0.0
    %1174 = vmatprep.subr.mxu0 0.0
    %1175 = vmatpush1.xpose.msra.mxu0 0.0
    %1176 = vmatprep.subr.mxu0 0.0
    %1177 = vmatpush1.xpose.msra.mxu0 0.0
    %1178 = vmatprep.subr.mxu0 0.0
    %1179 = vmatpush1.xpose.msra.mxu0 0.0
    %1180 = vmatprep.subr.mxu0 0.0
    %1181 = vmatpush1.xpose.msra.mxu0 0.0
    %1182 = vmatprep.subr.mxu0 0.0
    %1183 = vmatpush1.xpose.msra.mxu0 0.0
    %1184 = vmatprep.subr.mxu0 0.0
    %1185 = vmatpush1.xpose.msra.mxu0 0.0
    %1186 = vmatprep.subr.mxu0 0.0
    %1187 = vmatpush1.xpose.msra.mxu0 0.0
    %1188 = vmatprep.subr.mxu0 0.0
    %1189 = vmatpush1.xpose.msra.mxu0 0.0
    %1190 = vmatprep.subr.mxu0 0.0
    %1191 = vmatpush1.xpose.msra.mxu0 0.0
    %1192 = vmatprep.mubr.f32.mxu0 %v978
    %1193 = vmatmul.mubr.f32.gmra.mrb[0].mxu0 %v970
    %v1194 = vpop.f32.mrb[0].mxu0
    %v1195 = vadd.f32 %v1125, %v1194
    %v1196 = vpop.f32.mrb[0].mxu0
    %1197 = vdwg.mxu0
    %1198 = vmatprep.subr.mxu0 %v62
    %1199 = vmatpush1.xpose.msra.mxu0 %v61
    %1200 = vmatprep.subr.mxu0 0.0
    %1201 = vmatpush1.xpose.msra.mxu0 0.0
    %1202 = vmatprep.subr.mxu0 0.0
    %1203 = vmatpush1.xpose.msra.mxu0 0.0
    %1204 = vmatprep.subr.mxu0 0.0
    %1205 = vmatpush1.xpose.msra.mxu0 0.0
    %1206 = vmatprep.subr.mxu0 0.0
    %1207 = vmatpush1.xpose.msra.mxu0 0.0
    %1208 = vmatprep.subr.mxu0 0.0
    %1209 = vmatpush1.xpose.msra.mxu0 0.0
    %1210 = vmatprep.subr.mxu0 0.0
    %1211 = vmatpush1.xpose.msra.mxu0 0.0
    %1212 = vmatprep.subr.mxu0 0.0
    %1213 = vmatpush1.xpose.msra.mxu0 0.0
    %1214 = vmatprep.subr.mxu0 0.0
    %1215 = vmatpush1.xpose.msra.mxu0 0.0
    %1216 = vmatprep.subr.mxu0 0.0
    %1217 = vmatpush1.xpose.msra.mxu0 0.0
    %1218 = vmatprep.subr.mxu0 0.0
    %1219 = vmatpush1.xpose.msra.mxu0 0.0
    %1220 = vmatprep.subr.mxu0 0.0
    %1221 = vmatpush1.xpose.msra.mxu0 0.0
    %1222 = vmatprep.subr.mxu0 0.0
    %1223 = vmatpush1.xpose.msra.mxu0 0.0
    %1224 = vmatprep.subr.mxu0 0.0
    %1225 = vmatpush1.xpose.msra.mxu0 0.0
    %1226 = vmatprep.subr.mxu0 0.0
    %1227 = vmatpush1.xpose.msra.mxu0 0.0
    %1228 = vmatprep.subr.mxu0 0.0
    %1229 = vmatpush1.xpose.msra.mxu0 0.0
    %1230 = vmatprep.subr.mxu0 0.0
    %1231 = vmatpush1.xpose.msra.mxu0 0.0
    %1232 = vmatprep.subr.mxu0 0.0
    %1233 = vmatpush1.xpose.msra.mxu0 0.0
    %1234 = vmatprep.subr.mxu0 0.0
    %1235 = vmatpush1.xpose.msra.mxu0 0.0
    %1236 = vmatprep.subr.mxu0 0.0
    %1237 = vmatpush1.xpose.msra.mxu0 0.0
    %1238 = vmatprep.subr.mxu0 0.0
    %1239 = vmatpush1.xpose.msra.mxu0 0.0
    %1240 = vmatprep.subr.mxu0 0.0
    %1241 = vmatpush1.xpose.msra.mxu0 0.0
    %1242 = vmatprep.subr.mxu0 0.0
    %1243 = vmatpush1.xpose.msra.mxu0 0.0
    %1244 = vmatprep.subr.mxu0 0.0
    %1245 = vmatpush1.xpose.msra.mxu0 0.0
    %1246 = vmatprep.subr.mxu0 0.0
    %1247 = vmatpush1.xpose.msra.mxu0 0.0
    %1248 = vmatprep.subr.mxu0 0.0
    %1249 = vmatpush1.xpose.msra.mxu0 0.0
    %1250 = vmatprep.subr.mxu0 0.0
    %1251 = vmatpush1.xpose.msra.mxu0 0.0
    %1252 = vmatprep.subr.mxu0 0.0
    %1253 = vmatpush1.xpose.msra.mxu0 0.0
    %1254 = vmatprep.subr.mxu0 0.0
    %1255 = vmatpush1.xpose.msra.mxu0 0.0
    %1256 = vmatprep.subr.mxu0 0.0
    %1257 = vmatpush1.xpose.msra.mxu0 0.0
    %1258 = vmatprep.subr.mxu0 0.0
    %1259 = vmatpush1.xpose.msra.mxu0 0.0
    %1260 = vmatprep.subr.mxu0 0.0
    %1261 = vmatpush1.xpose.msra.mxu0 0.0
    %1262 = vmatprep.mubr.f32.mxu0 %v979
    %1263 = vmatmul.mubr.f32.gmra.mrb[0].mxu0 %v977
    %v1264 = vpop.f32.mrb[0].mxu0
    %v1265 = vadd.f32 %v1195, %v1264
    %v1266 = vpop.f32.mrb[0].mxu0
    %1267 = vdwg.mxu0
    %v1268 = vsel %vm536, %v1265, -inf
    %1269 = vmax.xlane.f32.xlu0 %v1268
    %v1270 = vpop.xlane.xlu0 %1269
    %v1271 = vsub.f32 %v1265, %v1270
    %v1272 = vmul.f32 %v1271, 1.442695
    %v1273 = vpow.pop %v1272
    %v1274 = vsel %vm536, %v1273, 0.0
    %1275 = vadd.xlane.f32.xlu0 %v1274
    %v1276 = vpop.xlane.xlu0 %1275
    %v1277 = vlog2.pop %v1276
    %v1278 = vmul.f32 %v1277, 0.6931472
    %v1279 = vsub.f32 %v1271, %v1278
    %v1280 = vsub.f32 %v550, %v1279
    %v1281 = vmul.f32 %v547, %v1280
    %v1282 = vsel %vm536, %v1281, 0.0
    %1283 = vadd.xlane.f32.xlu0 %v1282
    %v1284 = vpop.xlane.xlu0 %1283
    %v1285 = vsel %vm112, %v1284, 0.0
    %v1286 = vrot.slane %v1285, 4
    %v1287 = vadd.f32 %v1285, %v1286
    %v1288 = vrot.slane %v1287, 2
    %v1289 = vadd.f32 %v1287, %v1288
    %v1290 = vrot.slane %v1289, 1
    %v1291 = vadd.f32 %v1289, %v1290
    %v1292 = vmul.f32 %v1291, 0.5
    %vm1293 = vcmask 0
    %1294 = vst.msk [vmem:[#allocation8] sm:$0x1] %vm1293, %v1292
    // Predicated region
    $region30: #{tpu_custom_call.1} parent=1 // pred_check
      _
    $region31: #{tpu_custom_call.1} parent=1 // pred_check_branch
      %1296 = sbr.rel (0) target = $region33
    $region32: #{tpu_custom_call.1} parent=1 // pred_region
      %s1298 = ssub.s32 16, 16
      %1299 = vsyncadd [#allocation4], %s1298
      %s1301 = sshll.u32 [#allocation8], 4
      %s1302 = int_to_ptr.vmem [resolvable:$true] %s1301
      %1304 = dma.vmem_to_hbm [thread:$0]  %s1302, 16, %s4, [#allocation4]
    $region33: #{tpu_custom_call.1} parent=1 // pred_fallthru
      _
    // Predicated region
    $region34: #{tpu_custom_call.1} parent=1 // pred_check
      _
    $region35: #{tpu_custom_call.1} parent=1 // pred_check_branch
      %1306 = sbr.rel (0) target = $region37
    $region36: #{tpu_custom_call.1} parent=1 // pred_region
      %1307 = dma.done [#allocation4], 16
    $region37: #{tpu_custom_call.1} parent=1 // pred_fallthru
      _
    %1308 = vsyncpa [#allocation3], 1
    %1309 = vsyncpa [#allocation6], 1
    %1310 = vsyncpa [#allocation4], 1

</llo_original>
